<compile_context>
chip_gen: v5e
topology: v5e:2x2
jax: 0.10.0
libtpu: 0.0.40
codegen_flags: <defaults>
</compile_context>

<pallas_src>
import jax
import jax.numpy as jnp
from jax import lax
from jax.experimental import pallas as pl
from jax.experimental.pallas import tpu as pltpu

_BN_EPS = 1e-5
_MXU_DTYPE = jnp.bfloat16   # MXU operand dtype (f32 accumulation)


def _build_banded_weight(weight_oihw, W, dtype):
    """Fold the 3 horizontal taps + W zero-padding into banded matmul weights.

    Returns (3*W*Cin, W*Cout) where rows [dh*W*Cin:(dh+1)*W*Cin] hold band dh:
      band[dh, v*Cin + ci, w*Cout + co] = weight[co, ci, dh, dw]
    iff v == w + dw - 1 (input column v feeds output column w through
    horizontal tap dw, padding=1); out-of-range taps are simply absent
    (== the zero-padding contribution).  Stacking along K lets the whole 3x3
    conv run as ONE MXU matmul per image block.
    """
    Cout, Cin, KH, KW = weight_oihw.shape
    w_hwio = jnp.transpose(weight_oihw, (2, 3, 1, 0)).astype(jnp.float32)  # (3,3,Cin,Cout)
    pos = jnp.arange(W)
    bands = []
    for dh in range(KH):
        b = jnp.zeros((W, Cin, W, Cout), jnp.float32)
        for dw in range(KW):
            sel = (pos[:, None] == (pos[None, :] + dw - 1)).astype(jnp.float32)  # (v, w)
            b = b + sel[:, None, :, None] * w_hwio[dh, dw][None, :, None, :]
        bands.append(b.reshape(W * Cin, W * Cout))
    return jnp.concatenate(bands, axis=0).astype(dtype)   # (3*W*Cin, W*Cout)


def _conv_lhs(x, B, H, WCin):
    """Build the (B*H, 3*W*Cin) matmul LHS for the fused-K conv.

    For output row h the lanes are [input row h-1 | row h | row h+1]; rows
    outside [0, H) are zero (== the H zero-padding).  Built from the loaded
    block in 32-bit (robust concat lowering), cast to bf16 by the caller.
    """
    zrow = jnp.zeros((B, 1, WCin), x.dtype)
    top = jnp.concatenate([zrow, x[:, :H - 1, :]], axis=1)   # input row h-1
    bot = jnp.concatenate([x[:, 1:, :], zrow], axis=1)       # input row h+1
    lhs = jnp.concatenate([top, x, bot], axis=-1)            # (B, H, 3*W*Cin)
    return lhs.reshape(B * H, 3 * WCin)


def _make_stats_kernel(B, H, WCin, WCout):
    def kernel(x_ref, w_ref, stat_ref):
        # x_ref   : (B, H, W*Cin)        lane index = w*Cin + ci
        # w_ref   : (3*W*Cin, W*Cout)    stacked banded conv weights (bf16)
        # stat_ref: (1, 2, W*Cout)  f32  per-block [sum; sum of squares]
        lhs = _conv_lhs(x_ref[...], B, H, WCin).astype(_MXU_DTYPE)
        conv = jnp.dot(lhs, w_ref[...], preferred_element_type=jnp.float32)
        stat_ref[0, 0:1, :] = jnp.sum(conv, axis=0, keepdims=True)
        stat_ref[0, 1:2, :] = jnp.sum(conv * conv, axis=0, keepdims=True)
    return kernel


def _make_conv_bn_relu_kernel(B, H, WCin, WCout):
    def kernel(x_ref, w_ref, scale_ref, shift_ref, out_ref):
        # Recompute the conv (identical math to pass 1) and fuse BN + ReLU,
        # so the f32 conv never round-trips through HBM.
        lhs = _conv_lhs(x_ref[...], B, H, WCin).astype(_MXU_DTYPE)
        conv = jnp.dot(lhs, w_ref[...], preferred_element_type=jnp.float32)
        y = jnp.maximum(conv * scale_ref[...] + shift_ref[...], 0.0)
        out_ref[...] = y.reshape(B, H, WCout).astype(out_ref.dtype)
    return kernel


def _pick_image_block(N, H, target_rows=256):
    """Images per grid step: target ~256 matmul rows per block (fills MXU M,
    amortizes per-step overhead), keeping B a divisor of N.
    NOTE (v7x): at real batch sizes prefer >=2 grid steps so both TCs work."""
    b = max(1, min(N, target_rows // max(H, 1)))
    while N % b:
        b -= 1
    return b


@jax.jit
def encoder_block(x_nchw, weight_oihw, gamma, beta):
    """Fused Conv3x3(s1,p1,no bias) + BatchNorm2d(train stats) + ReLU.

    x_nchw      : (N, Cin, H, W)   -- PyTorch layout
    weight_oihw : (Cout, Cin, 3, 3)
    gamma, beta : (Cout,)
    returns     : (N, Cout, H, W)
    """
    N, Cin, H, W = x_nchw.shape
    Cout = weight_oihw.shape[0]
    WCin, WCout = W * Cin, W * Cout
    B = _pick_image_block(N, H)
    nb = N // B

    # Boundary glue required by the NCHW interface: one fused relayout to the
    # lane-dense per-image layout (lane index = w*Cin + ci).
    x2d = jnp.transpose(x_nchw, (0, 2, 3, 1)).reshape(N, H, WCin)
    wstack = _build_banded_weight(weight_oihw, W, _MXU_DTYPE)   # (3*WCin, WCout)

    cparams = pltpu.CompilerParams(
        dimension_semantics=("parallel",),        # image-block axis -> both v7x TCs
        vmem_limit_bytes=32 * 1024 * 1024)        # v7x-safe scoped budget

    # Grid-constant banded weight: single-buffered (saves one VMEM copy + DMA
    # headroom on v7x's 64 MiB).
    w_spec = pl.BlockSpec((3 * WCin, WCout), lambda n: (0, 0),
                          pipeline_mode=pl.Buffered(1))
    x_spec = pl.BlockSpec((B, H, WCin), lambda n: (n, 0, 0))

    # ---- pass 1: per-block BN partial sums only (no conv intermediate) ----
    stats = pl.pallas_call(
        _make_stats_kernel(B, H, WCin, WCout),
        grid=(nb,),
        in_specs=[x_spec, w_spec],
        out_specs=pl.BlockSpec((1, 2, WCout), lambda n: (n, 0, 0)),
        out_shape=jax.ShapeDtypeStruct((nb, 2, WCout), jnp.float32),
        compiler_params=cparams,
    )(x2d, wstack)

    # ---- tiny cross-block reduction + fold BN affine into scale/shift ----
    # NOTE: E[x^2]-E[x]^2 in f32 matches the reference at these scales; a
    # shifted / two-pass variance would be safer for large-mean activations.
    cnt = N * H * W
    s = stats[:, 0, :].reshape(nb, W, Cout).sum(axis=(0, 1))
    sq = stats[:, 1, :].reshape(nb, W, Cout).sum(axis=(0, 1))
    mean = s / cnt
    var = jnp.maximum(sq / cnt - mean * mean, 0.0)   # biased var (train-mode norm)
    scale = gamma.astype(jnp.float32) * lax.rsqrt(var + _BN_EPS)
    shift = beta.astype(jnp.float32) - mean * scale
    scale_l = jnp.tile(scale, (W,)).reshape(1, WCout)   # lane index = w*Cout + co
    shift_l = jnp.tile(shift, (W,)).reshape(1, WCout)

    # ---- pass 2: conv (recomputed) + BN + ReLU fused, lane-dense stores ----
    out2d = pl.pallas_call(
        _make_conv_bn_relu_kernel(B, H, WCin, WCout),
        grid=(nb,),
        in_specs=[
            x_spec,
            w_spec,
            pl.BlockSpec((1, WCout), lambda n: (0, 0)),
            pl.BlockSpec((1, WCout), lambda n: (0, 0)),
        ],
        out_specs=pl.BlockSpec((B, H, WCout), lambda n: (n, 0, 0)),
        out_shape=jax.ShapeDtypeStruct((N, H, WCout), x_nchw.dtype),
        compiler_params=cparams,
    )(x2d, wstack, scale_l, shift_l)

    # Boundary glue back to the PyTorch NCHW layout (one fused relayout).
    out = out2d.reshape(N, H, W, Cout)
    return jnp.transpose(out, (0, 3, 1, 2))


def _reference(x_nchw, weight_oihw, gamma, beta):
    """Pure-JAX f32 reference mirroring the PyTorch forward (use_bn=True, train)."""
    x_nhwc = jnp.transpose(x_nchw, (0, 2, 3, 1)).astype(jnp.float32)
    w_hwio = jnp.transpose(weight_oihw, (2, 3, 1, 0)).astype(jnp.float32)
    conv = lax.conv_general_dilated(
        x_nhwc, w_hwio, window_strides=(1, 1), padding="SAME",
        dimension_numbers=("NHWC", "HWIO", "NHWC"))
    mean = jnp.mean(conv, axis=(0, 1, 2), keepdims=True)
    var = jnp.mean((conv - mean) ** 2, axis=(0, 1, 2), keepdims=True)
    normed = (conv - mean) * lax.rsqrt(var + _BN_EPS) * gamma + beta
    out = jnp.maximum(normed, 0.0)
    return jnp.transpose(out, (0, 3, 1, 2))


if __name__ == "__main__":
    # Small deterministic shapes: EncoderBlock(in_feature=4, out_future=8)
    N, Cin, Cout, H, W = 2, 4, 8, 16, 16
    key = jax.random.PRNGKey(0)
    kx, kw, kg, kb = jax.random.split(key, 4)

    x = jax.random.normal(kx, (N, Cin, H, W), dtype=jnp.float32)
    # Conv weight (bias=False since use_bn=True); deterministic init.
    weight = jax.random.normal(kw, (Cout, Cin, 3, 3), dtype=jnp.float32) * 0.1
    # BatchNorm affine params (perturbed from gamma=1 / beta=0 so the affine
    # path is actually exercised).
    gamma = 1.0 + 0.1 * jax.random.normal(kg, (Cout,), dtype=jnp.float32)
    beta = 0.1 * jax.random.normal(kb, (Cout,), dtype=jnp.float32)

    out = jax.block_until_ready(encoder_block(x, weight, gamma, beta))
    ref = jax.block_until_ready(_reference(x, weight, gamma, beta))

    assert out.shape == (N, Cout, H, W), out.shape
    # bf16 MXU operands (K_eff = 36, f32 accumulation) introduce O(1e-2)
    # post-normalization error vs the f32 reference -> tolerance relaxed from
    # the pure-f32 1e-4 of v1.
    assert jnp.allclose(out, ref, atol=3e-2, rtol=3e-2), (
        float(jnp.max(jnp.abs(out - ref))))

    print("KERNEL_OK")
</pallas_src>

<mosaic_0001>
module attributes {stable_mosaic.version = 11 : i64} {
  func.func @kernel(%arg0: i32, %arg1: memref<2x16x64xf32, #tpu.memory_space<vmem>>, %arg2: memref<192x128xbf16, #tpu.memory_space<vmem>>, %arg3: memref<1x2x128xf32, #tpu.memory_space<vmem>>) attributes {dimension_semantics = [#tpu.dimension_semantics<parallel>], iteration_bounds = array<i64: 1>, scalar_prefetch = 0 : i64, scratch_operands = 0 : i64, tpu.core_type = #tpu.core_type<tc>, window_params = [{transform_indices = @transform_0, window_bounds = array<i64: 2, 16, 64>}, {pipeline_mode = #tpu.pipeline_mode<synchronous>, transform_indices = @transform_1, window_bounds = array<i64: 192, 128>}, {transform_indices = @transform_2, window_bounds = array<i64: 1, 2, 128>}]} {
    %c0 = arith.constant 0 : index
    %c0_0 = arith.constant 0 : index
    %c0_1 = arith.constant 0 : index
    %0 = vector.load %arg1[%c0, %c0_0, %c0_1] : memref<2x16x64xf32, #tpu.memory_space<vmem>>, vector<2x16x64xf32>
    %cst = arith.constant 0.000000e+00 : f32
    %1 = vector.broadcast %cst : f32 to vector<2x1x64xf32>
    %2 = vector.extract_strided_slice %0 {offsets = [0, 0, 0], sizes = [2, 15, 64], strides = [1, 1, 1]} : vector<2x16x64xf32> to vector<2x15x64xf32>
    %3 = tpu.concatenate %1, %2 in 1 : vector<2x1x64xf32>, vector<2x15x64xf32> -> vector<2x16x64xf32>
    %4 = vector.extract_strided_slice %0 {offsets = [0, 1, 0], sizes = [2, 15, 64], strides = [1, 1, 1]} : vector<2x16x64xf32> to vector<2x15x64xf32>
    %5 = tpu.concatenate %4, %1 in 1 : vector<2x15x64xf32>, vector<2x1x64xf32> -> vector<2x16x64xf32>
    %6 = tpu.concatenate %3, %0, %5 in 2 : vector<2x16x64xf32>, vector<2x16x64xf32>, vector<2x16x64xf32> -> vector<2x16x192xf32>
    %7 = vector.shape_cast %6 : vector<2x16x192xf32> to vector<32x192xf32>
    %8 = arith.truncf %7 : vector<32x192xf32> to vector<32x192xbf16>
    %c0_2 = arith.constant 0 : index
    %c0_3 = arith.constant 0 : index
    %9 = vector.load %arg2[%c0_2, %c0_3] : memref<192x128xbf16, #tpu.memory_space<vmem>>, vector<192x128xbf16>
    %cst_4 = arith.constant dense<0.000000e+00> : vector<32x128xf32>
    %10 = tpu.matmul %8, %9, %cst_4 {dimension_numbers = #tpu.dot_dimension_numbers<[1], [0], [0], [1], [0, 0, 1, 1], [], []>} : vector<32x192xbf16>, vector<192x128xbf16>, vector<32x128xf32> -> vector<32x128xf32>
    %cst_5 = arith.constant dense<0.000000e+00> : vector<128xf32>
    %11 = vector.multi_reduction <add>, %10, %cst_5 [0] : vector<32x128xf32> to vector<128xf32>
    %12 = vector.shape_cast %11 : vector<128xf32> to vector<1x128xf32>
    %c0_6 = arith.constant 0 : index
    %c0_7 = arith.constant 0 : index
    %c0_8 = arith.constant 0 : index
    %13 = vector.load %arg3[%c0_6, %c0_7, %c0_8] : memref<1x2x128xf32, #tpu.memory_space<vmem>>, vector<1x1x128xf32>
    %14 = vector.shape_cast %13 : vector<1x1x128xf32> to vector<1x128xf32>
    %15 = vector.shape_cast %12 : vector<1x128xf32> to vector<1x1x128xf32>
    tpu.vector_store %arg3[%c0_6, %c0_7, %c0_8], %15 {strides = array<i32>} : memref<1x2x128xf32, #tpu.memory_space<vmem>>, vector<1x1x128xf32>,
    %16 = arith.mulf %10, %10 : vector<32x128xf32>
    %cst_9 = arith.constant dense<0.000000e+00> : vector<128xf32>
    %17 = vector.multi_reduction <add>, %16, %cst_9 [0] : vector<32x128xf32> to vector<128xf32>
    %18 = vector.shape_cast %17 : vector<128xf32> to vector<1x128xf32>
    %c0_10 = arith.constant 0 : index
    %c1 = arith.constant 1 : index
    %c0_11 = arith.constant 0 : index
    %19 = vector.load %arg3[%c0_10, %c1, %c0_11] : memref<1x2x128xf32, #tpu.memory_space<vmem>>, vector<1x1x128xf32>
    %20 = vector.shape_cast %19 : vector<1x1x128xf32> to vector<1x128xf32>
    %21 = vector.shape_cast %18 : vector<1x128xf32> to vector<1x1x128xf32>
    tpu.vector_store %arg3[%c0_10, %c1, %c0_11], %21 {strides = array<i32>} : memref<1x2x128xf32, #tpu.memory_space<vmem>>, vector<1x1x128xf32>,
    return
  }
  func.func @transform_0(%arg0: i32) -> (i32, i32, i32) {
    %c0_i32 = arith.constant 0 : i32
    %c0_i32_0 = arith.constant 0 : i32
    %c0_i32_1 = arith.constant 0 : i32
    return %arg0, %c0_i32, %c0_i32_0 : i32, i32, i32
  }
  func.func @transform_1(%arg0: i32) -> (i32, i32) {
    %c0_i32 = arith.constant 0 : i32
    %c0_i32_0 = arith.constant 0 : i32
    %c0_i32_1 = arith.constant 0 : i32
    return %c0_i32, %c0_i32_0 : i32, i32
  }
  func.func @transform_2(%arg0: i32) -> (i32, i32, i32) {
    %c0_i32 = arith.constant 0 : i32
    %c0_i32_0 = arith.constant 0 : i32
    %c0_i32_1 = arith.constant 0 : i32
    return %arg0, %c0_i32, %c0_i32_0 : i32, i32, i32
  }
}

module attributes {stable_mosaic.version = 11 : i64} {
  func.func @kernel(%arg0: i32, %arg1: memref<2x16x64xf32, #tpu.memory_space<vmem>>, %arg2: memref<192x128xbf16, #tpu.memory_space<vmem>>, %arg3: memref<1x128xf32, #tpu.memory_space<vmem>>, %arg4: memref<1x128xf32, #tpu.memory_space<vmem>>, %arg5: memref<2x16x128xf32, #tpu.memory_space<vmem>>) attributes {dimension_semantics = [#tpu.dimension_semantics<parallel>], iteration_bounds = array<i64: 1>, scalar_prefetch = 0 : i64, scratch_operands = 0 : i64, tpu.core_type = #tpu.core_type<tc>, window_params = [{transform_indices = @transform_0, window_bounds = array<i64: 2, 16, 64>}, {pipeline_mode = #tpu.pipeline_mode<synchronous>, transform_indices = @transform_1, window_bounds = array<i64: 192, 128>}, {pipeline_mode = #tpu.pipeline_mode<synchronous>, transform_indices = @transform_2, window_bounds = array<i64: 1, 128>}, {pipeline_mode = #tpu.pipeline_mode<synchronous>, transform_indices = @transform_3, window_bounds = array<i64: 1, 128>}, {transform_indices = @transform_4, window_bounds = array<i64: 2, 16, 128>}]} {
    %c0 = arith.constant 0 : index
    %c0_0 = arith.constant 0 : index
    %c0_1 = arith.constant 0 : index
    %0 = vector.load %arg1[%c0, %c0_0, %c0_1] : memref<2x16x64xf32, #tpu.memory_space<vmem>>, vector<2x16x64xf32>
    %cst = arith.constant 0.000000e+00 : f32
    %1 = vector.broadcast %cst : f32 to vector<2x1x64xf32>
    %2 = vector.extract_strided_slice %0 {offsets = [0, 0, 0], sizes = [2, 15, 64], strides = [1, 1, 1]} : vector<2x16x64xf32> to vector<2x15x64xf32>
    %3 = tpu.concatenate %1, %2 in 1 : vector<2x1x64xf32>, vector<2x15x64xf32> -> vector<2x16x64xf32>
    %4 = vector.extract_strided_slice %0 {offsets = [0, 1, 0], sizes = [2, 15, 64], strides = [1, 1, 1]} : vector<2x16x64xf32> to vector<2x15x64xf32>
    %5 = tpu.concatenate %4, %1 in 1 : vector<2x15x64xf32>, vector<2x1x64xf32> -> vector<2x16x64xf32>
    %6 = tpu.concatenate %3, %0, %5 in 2 : vector<2x16x64xf32>, vector<2x16x64xf32>, vector<2x16x64xf32> -> vector<2x16x192xf32>
    %7 = vector.shape_cast %6 : vector<2x16x192xf32> to vector<32x192xf32>
    %8 = arith.truncf %7 : vector<32x192xf32> to vector<32x192xbf16>
    %c0_2 = arith.constant 0 : index
    %c0_3 = arith.constant 0 : index
    %9 = vector.load %arg2[%c0_2, %c0_3] : memref<192x128xbf16, #tpu.memory_space<vmem>>, vector<192x128xbf16>
    %cst_4 = arith.constant dense<0.000000e+00> : vector<32x128xf32>
    %10 = tpu.matmul %8, %9, %cst_4 {dimension_numbers = #tpu.dot_dimension_numbers<[1], [0], [0], [1], [0, 0, 1, 1], [], []>} : vector<32x192xbf16>, vector<192x128xbf16>, vector<32x128xf32> -> vector<32x128xf32>
    %c0_5 = arith.constant 0 : index
    %c0_6 = arith.constant 0 : index
    %11 = vector.load %arg3[%c0_5, %c0_6] : memref<1x128xf32, #tpu.memory_space<vmem>>, vector<1x128xf32>
    %12 = vector.broadcast %11 : vector<1x128xf32> to vector<32x128xf32>
    %13 = arith.mulf %10, %12 : vector<32x128xf32>
    %c0_7 = arith.constant 0 : index
    %c0_8 = arith.constant 0 : index
    %14 = vector.load %arg4[%c0_7, %c0_8] : memref<1x128xf32, #tpu.memory_space<vmem>>, vector<1x128xf32>
    %15 = vector.broadcast %14 : vector<1x128xf32> to vector<32x128xf32>
    %16 = arith.addf %13, %15 : vector<32x128xf32>
    %cst_9 = arith.constant 0.000000e+00 : f32
    %17 = vector.broadcast %cst_9 : f32 to vector<32x128xf32>
    %18 = arith.maximumf %16, %17 : vector<32x128xf32>
    %19 = vector.shape_cast %18 : vector<32x128xf32> to vector<2x16x128xf32>
    %c0_10 = arith.constant 0 : index
    %c0_11 = arith.constant 0 : index
    %c0_12 = arith.constant 0 : index
    %20 = vector.load %arg5[%c0_10, %c0_11, %c0_12] : memref<2x16x128xf32, #tpu.memory_space<vmem>>, vector<2x16x128xf32>
    tpu.vector_store %arg5[%c0_10, %c0_11, %c0_12], %19 {strides = array<i32>} : memref<2x16x128xf32, #tpu.memory_space<vmem>>, vector<2x16x128xf32>,
    return
  }
  func.func @transform_0(%arg0: i32) -> (i32, i32, i32) {
    %c0_i32 = arith.constant 0 : i32
    %c0_i32_0 = arith.constant 0 : i32
    %c0_i32_1 = arith.constant 0 : i32
    return %arg0, %c0_i32, %c0_i32_0 : i32, i32, i32
  }
  func.func @transform_1(%arg0: i32) -> (i32, i32) {
    %c0_i32 = arith.constant 0 : i32
    %c0_i32_0 = arith.constant 0 : i32
    %c0_i32_1 = arith.constant 0 : i32
    return %c0_i32, %c0_i32_0 : i32, i32
  }
  func.func @transform_2(%arg0: i32) -> (i32, i32) {
    %c0_i32 = arith.constant 0 : i32
    %c0_i32_0 = arith.constant 0 : i32
    %c0_i32_1 = arith.constant 0 : i32
    return %c0_i32, %c0_i32_0 : i32, i32
  }
  func.func @transform_3(%arg0: i32) -> (i32, i32) {
    %c0_i32 = arith.constant 0 : i32
    %c0_i32_0 = arith.constant 0 : i32
    %c0_i32_1 = arith.constant 0 : i32
    return %c0_i32, %c0_i32_0 : i32, i32
  }
  func.func @transform_4(%arg0: i32) -> (i32, i32, i32) {
    %c0_i32 = arith.constant 0 : i32
    %c0_i32_0 = arith.constant 0 : i32
    %c0_i32_1 = arith.constant 0 : i32
    return %arg0, %c0_i32, %c0_i32_0 : i32, i32, i32
  }
}

</mosaic_0001>

<llo_original>
// kernel: squeeze.21
$region0: #{squeeze.21}
  %s0 = inlined_call_operand.vmem [shape: f32[128], index: 0, kind: input, shape index: {}]
  %s1 = inlined_call_operand.vmem [shape: f32[16,8], index: 1, kind: output, shape index: {}]
  $region1: #{squeeze.21} parent=0
    #allocation0 [shape = 'u8[4096]{0}', space=vmem, size = 0x1000, scoped, tag = 'scoped mem for input reshape']
    %s3 = ssub.s32 2, 1
    %v4 = vld [vmem:[%s0] sm:%s3]
    %5 = vst [vmem:[#allocation0] sm:%s3] %v4
    %v6 = vld [vmem:[#allocation0] sm:$0x1]
    %vm7 = vcmask 64512
    %8 = vst.msk [vmem:[%s1] sm:$0x1] %vm7, %v6
    %v9 = vld [vmem:[#allocation0] sm:$0x1]
    %10 = vrot.lane.b32.xlu0 %v9, 120
    %v11 = vpop.permute.xlu0 %10
    %vm12 = vcmask 64512
    %s13 = scalar_lea.vmem %s1, 1
    %14 = vst.msk [vmem:[%s13] sm:$0x1] %vm12, %v11
    %v15 = vld [vmem:[#allocation0] sm:$0x1]
    %16 = vrot.lane.b32.xlu0 %v15, 112
    %v17 = vpop.permute.xlu0 %16
    %vm18 = vcmask 64512
    %s19 = scalar_lea.vmem %s1, 2
    %20 = vst.msk [vmem:[%s19] sm:$0x1] %vm18, %v17
    %v21 = vld [vmem:[#allocation0] sm:$0x1]
    %22 = vrot.lane.b32.xlu0 %v21, 104
    %v23 = vpop.permute.xlu0 %22
    %vm24 = vcmask 64512
    %s25 = scalar_lea.vmem %s1, 3
    %26 = vst.msk [vmem:[%s25] sm:$0x1] %vm24, %v23
    %v27 = vld [vmem:[#allocation0] sm:$0x1]
    %28 = vrot.lane.b32.xlu0 %v27, 96
    %v29 = vpop.permute.xlu0 %28
    %vm30 = vcmask 64512
    %s31 = scalar_lea.vmem %s1, 4
    %32 = vst.msk [vmem:[%s31] sm:$0x1] %vm30, %v29
    %v33 = vld [vmem:[#allocation0] sm:$0x1]
    %34 = vrot.lane.b32.xlu0 %v33, 88
    %v35 = vpop.permute.xlu0 %34
    %vm36 = vcmask 64512
    %s37 = scalar_lea.vmem %s1, 5
    %38 = vst.msk [vmem:[%s37] sm:$0x1] %vm36, %v35
    %v39 = vld [vmem:[#allocation0] sm:$0x1]
    %40 = vrot.lane.b32.xlu0 %v39, 80
    %v41 = vpop.permute.xlu0 %40
    %vm42 = vcmask 64512
    %s43 = scalar_lea.vmem %s1, 6
    %44 = vst.msk [vmem:[%s43] sm:$0x1] %vm42, %v41
    %v45 = vld [vmem:[#allocation0] sm:$0x1]
    %46 = vrot.lane.b32.xlu0 %v45, 72
    %v47 = vpop.permute.xlu0 %46
    %vm48 = vcmask 64512
    %s49 = scalar_lea.vmem %s1, 7
    %50 = vst.msk [vmem:[%s49] sm:$0x1] %vm48, %v47
    %v51 = vld [vmem:[#allocation0] sm:$0x1]
    %52 = vrot.lane.b32.xlu0 %v51, 64
    %v53 = vpop.permute.xlu0 %52
    %vm54 = vcmask 64512
    %s55 = scalar_lea.vmem %s1, 8
    %56 = vst.msk [vmem:[%s55] sm:$0x1] %vm54, %v53
    %v57 = vld [vmem:[#allocation0] sm:$0x1]
    %58 = vrot.lane.b32.xlu0 %v57, 56
    %v59 = vpop.permute.xlu0 %58
    %vm60 = vcmask 64512
    %s61 = scalar_lea.vmem %s1, 9
    %62 = vst.msk [vmem:[%s61] sm:$0x1] %vm60, %v59
    %v63 = vld [vmem:[#allocation0] sm:$0x1]
    %64 = vrot.lane.b32.xlu0 %v63, 48
    %v65 = vpop.permute.xlu0 %64
    %vm66 = vcmask 64512
    %s67 = scalar_lea.vmem %s1, 10
    %68 = vst.msk [vmem:[%s67] sm:$0x1] %vm66, %v65
    %v69 = vld [vmem:[#allocation0] sm:$0x1]
    %70 = vrot.lane.b32.xlu0 %v69, 40
    %v71 = vpop.permute.xlu0 %70
    %vm72 = vcmask 64512
    %s73 = scalar_lea.vmem %s1, 11
    %74 = vst.msk [vmem:[%s73] sm:$0x1] %vm72, %v71
    %v75 = vld [vmem:[#allocation0] sm:$0x1]
    %76 = vrot.lane.b32.xlu0 %v75, 32
    %v77 = vpop.permute.xlu0 %76
    %vm78 = vcmask 64512
    %s79 = scalar_lea.vmem %s1, 12
    %80 = vst.msk [vmem:[%s79] sm:$0x1] %vm78, %v77
    %v81 = vld [vmem:[#allocation0] sm:$0x1]
    %82 = vrot.lane.b32.xlu0 %v81, 24
    %v83 = vpop.permute.xlu0 %82
    %vm84 = vcmask 64512
    %s85 = scalar_lea.vmem %s1, 13
    %86 = vst.msk [vmem:[%s85] sm:$0x1] %vm84, %v83
    %v87 = vld [vmem:[#allocation0] sm:$0x1]
    %88 = vrot.lane.b32.xlu0 %v87, 16
    %v89 = vpop.permute.xlu0 %88
    %vm90 = vcmask 64512
    %s91 = scalar_lea.vmem %s1, 14
    %92 = vst.msk [vmem:[%s91] sm:$0x1] %vm90, %v89
    %v93 = vld [vmem:[#allocation0] sm:$0x1]
    %94 = vrot.lane.b32.xlu0 %v93, 8
    %v95 = vpop.permute.xlu0 %94
    %vm96 = vcmask 64512
    %s97 = scalar_lea.vmem %s1, 15
    %98 = vst.msk [vmem:[%s97] sm:$0x1] %vm96, %v95

// kernel: tile.13
$region0: #{tile.13}
  #allocation0 [shape = 's32[1]{0}', space=sflag, size = 0x4, scoped, tag = 'scoped memory for tile.13']
  %s0 = inlined_call_operand.vmem [shape: f32[8], index: 0, kind: input, shape index: {}]
  %s1 = inlined_call_operand.vmem [shape: f32[16,8], index: 1, kind: output, shape index: {}]
  // Predicated region
  $region2: #{tile.13} parent=0 // pred_check
    _
  $region3: #{tile.13} parent=0 // pred_check_branch
    %3 = sbr.rel (0) target = $region5
  $region4: #{tile.13} parent=0 // pred_region
    _
  $region5: #{tile.13} parent=0 // pred_fallthru
    _
  %v4 = vld [vmem:[%s0] ss:$0 sm:$0xff]
  %5 = vst [vmem:[%s1] sm:$0xff] %v4
  %s6 = scalar_lea.vmem %s1, 8
  %7 = vst [vmem:[%s6] sm:$0xff] %v4

// kernel: tile.14
$region0: #{tile.14}
  %s0 = inlined_call_operand.vmem [shape: f32[16,8], index: 0, kind: input, shape index: {}]
  %s1 = inlined_call_operand.vmem [shape: f32[1,128], index: 1, kind: output, shape index: {}]
  $region1: #{tile.14} parent=0
    #allocation0 [shape = 'u8[4096]{0}', space=vmem, size = 0x1000, scoped, tag = 'scoped mem for output reshape']
    %v2 = vld [vmem:[%s0] sm:$0x1]
    %vm3 = vcmask 64512
    %4 = vst.msk [vmem:[#allocation0] sm:$0x1] %vm3, %v2
    %s5 = scalar_lea.vmem %s0, 15
    %v6 = vld [vmem:[%s5] sm:$0x1]
    %7 = vrot.lane.b32.xlu0 %v6, 120
    %v8 = vpop.permute.xlu0 %7
    %vm9 = vcmask 1048512
    %10 = vst.msk [vmem:[#allocation0] sm:$0x1] %vm9, %v8
    %s11 = scalar_lea.vmem %s0, 14
    %v12 = vld [vmem:[%s11] sm:$0x1]
    %13 = vrot.lane.b32.xlu0 %v12, 112
    %v14 = vpop.permute.xlu0 %13
    %vm15 = vcmask 982912
    %16 = vst.msk [vmem:[#allocation0] sm:$0x1] %vm15, %v14
    %s17 = scalar_lea.vmem %s0, 13
    %v18 = vld [vmem:[%s17] sm:$0x1]
    %19 = vrot.lane.b32.xlu0 %v18, 104
    %v20 = vpop.permute.xlu0 %19
    %vm21 = vcmask 917312
    %22 = vst.msk [vmem:[#allocation0] sm:$0x1] %vm21, %v20
    %s23 = scalar_lea.vmem %s0, 12
    %v24 = vld [vmem:[%s23] sm:$0x1]
    %25 = vrot.lane.b32.xlu0 %v24, 96
    %v26 = vpop.permute.xlu0 %25
    %vm27 = vcmask 851712
    %28 = vst.msk [vmem:[#allocation0] sm:$0x1] %vm27, %v26
    %s29 = scalar_lea.vmem %s0, 11
    %v30 = vld [vmem:[%s29] sm:$0x1]
    %31 = vrot.lane.b32.xlu0 %v30, 88
    %v32 = vpop.permute.xlu0 %31
    %vm33 = vcmask 786112
    %34 = vst.msk [vmem:[#allocation0] sm:$0x1] %vm33, %v32
    %s35 = scalar_lea.vmem %s0, 10
    %v36 = vld [vmem:[%s35] sm:$0x1]
    %37 = vrot.lane.b32.xlu0 %v36, 80
    %v38 = vpop.permute.xlu0 %37
    %vm39 = vcmask 720512
    %40 = vst.msk [vmem:[#allocation0] sm:$0x1] %vm39, %v38
    %s41 = scalar_lea.vmem %s0, 9
    %v42 = vld [vmem:[%s41] sm:$0x1]
    %43 = vrot.lane.b32.xlu0 %v42, 72
    %v44 = vpop.permute.xlu0 %43
    %vm45 = vcmask 654912
    %46 = vst.msk [vmem:[#allocation0] sm:$0x1] %vm45, %v44
    %s47 = scalar_lea.vmem %s0, 8
    %v48 = vld [vmem:[%s47] sm:$0x1]
    %49 = vrot.lane.b32.xlu0 %v48, 64
    %v50 = vpop.permute.xlu0 %49
    %vm51 = vcmask 589312
    %52 = vst.msk [vmem:[#allocation0] sm:$0x1] %vm51, %v50
    %s53 = scalar_lea.vmem %s0, 7
    %v54 = vld [vmem:[%s53] sm:$0x1]
    %55 = vrot.lane.b32.xlu0 %v54, 56
    %v56 = vpop.permute.xlu0 %55
    %vm57 = vcmask 523712
    %58 = vst.msk [vmem:[#allocation0] sm:$0x1] %vm57, %v56
    %s59 = scalar_lea.vmem %s0, 6
    %v60 = vld [vmem:[%s59] sm:$0x1]
    %61 = vrot.lane.b32.xlu0 %v60, 48
    %v62 = vpop.permute.xlu0 %61
    %vm63 = vcmask 458112
    %64 = vst.msk [vmem:[#allocation0] sm:$0x1] %vm63, %v62
    %s65 = scalar_lea.vmem %s0, 5
    %v66 = vld [vmem:[%s65] sm:$0x1]
    %67 = vrot.lane.b32.xlu0 %v66, 40
    %v68 = vpop.permute.xlu0 %67
    %vm69 = vcmask 392512
    %70 = vst.msk [vmem:[#allocation0] sm:$0x1] %vm69, %v68
    %s71 = scalar_lea.vmem %s0, 4
    %v72 = vld [vmem:[%s71] sm:$0x1]
    %73 = vrot.lane.b32.xlu0 %v72, 32
    %v74 = vpop.permute.xlu0 %73
    %vm75 = vcmask 326912
    %76 = vst.msk [vmem:[#allocation0] sm:$0x1] %vm75, %v74
    %s77 = scalar_lea.vmem %s0, 3
    %v78 = vld [vmem:[%s77] sm:$0x1]
    %79 = vrot.lane.b32.xlu0 %v78, 24
    %v80 = vpop.permute.xlu0 %79
    %vm81 = vcmask 261312
    %82 = vst.msk [vmem:[#allocation0] sm:$0x1] %vm81, %v80
    %s83 = scalar_lea.vmem %s0, 2
    %v84 = vld [vmem:[%s83] sm:$0x1]
    %85 = vrot.lane.b32.xlu0 %v84, 16
    %v86 = vpop.permute.xlu0 %85
    %vm87 = vcmask 195712
    %88 = vst.msk [vmem:[#allocation0] sm:$0x1] %vm87, %v86
    %s89 = scalar_lea.vmem %s0, 1
    %v90 = vld [vmem:[%s89] sm:$0x1]
    %91 = vrot.lane.b32.xlu0 %v90, 8
    %v92 = vpop.permute.xlu0 %91
    %vm93 = vcmask 130112
    %94 = vst.msk [vmem:[#allocation0] sm:$0x1] %vm93, %v92
    %s96 = ssub.s32 2, 1
    %v97 = vld [vmem:[#allocation0] sm:%s96]
    %s99 = ssub.s32 2, 1
    %100 = vst [vmem:[%s1] sm:%s99] %v97

// kernel: encoder_block.2
$region0: #{encoder_block.2}
  #allocation0 [shape = 'u32[]', space=smem, size = 0x4, offset = 0x4, fixed_abs, tag = 'smem constant byte address 0x4 - core index']
  #allocation1 [shape = 'u32[72,128]{1,0:T(1,128)}', space=vmem, size = 0x9000, scoped, tag = 'internal scratch']
  %s0 = inlined_call_operand.vmem [shape: f32[2,16,64], index: 0, kind: input, shape index: {}]
  %s1 = inlined_call_operand.vmem [shape: bf16[192,128], index: 1, kind: input, shape index: {}]
  %s2 = inlined_call_operand.vmem [shape: f32[1,2,128], index: 2, kind: output, shape index: {}]
  %s3 = sld [smem:[#allocation0]]
  $region18: #{encoder_block.2} parent=0
    _
  %s5 = ssub.s32 1, %s3
  %s6 = scalar_select 0, %s5, %s3
  // Predicated region
  $region2: #{encoder_block.2} parent=0 // pred_check
    _
  $region3: #{encoder_block.2} parent=0 // pred_check_branch
    %8 = sbr.rel (0) target = $region5
  $region4: #{encoder_block.2} parent=0 // pred_region
    _
  $region5: #{encoder_block.2} parent=0 // pred_fallthru
    _
  // Predicated region
  $region6: #{encoder_block.2} parent=0 // pred_check
    _
  $region7: #{encoder_block.2} parent=0 // pred_check_branch
    %10 = sbr.rel (0) target = $region9
  $region8: #{encoder_block.2} parent=0 // pred_region
    _
  $region9: #{encoder_block.2} parent=0 // pred_fallthru
    _
  %v12 = vld [vmem:[%s0] sm:$0xff]
  %v13 = vld [vmem:[%s0 + $0x8] sm:$0xff]
  %v14 = vld [vmem:[%s0 + $0x10] sm:$0xff]
  %v15 = vld [vmem:[%s0 + $0x18] sm:$0xff]
  %vm20 = vcmask 1040384
  %v21 = vrot.slane %v12, 7
  %v22 = vrot.slane %v13, 7
  %v23 = vsel %vm20, %v21, %v22
  %v24 = vrot.slane %v14, 7
  %v25 = vrot.slane %v15, 7
  %v26 = vsel %vm20, %v24, %v25
  %v31 = vsel %vm20, 0.0, %v21
  %v32 = vsel %vm20, 0.0, %v24
  %vm33 = vcmask 1046528
  %v34 = vrot.slane %v12, 1
  %v35 = vrot.slane %v13, 1
  %v36 = vsel %vm33, %v34, %v35
  %v37 = vrot.slane %v14, 1
  %v38 = vrot.slane %v15, 1
  %v39 = vsel %vm33, %v37, %v38
  %v44 = vsel %vm33, %v35, 0.0
  %v45 = vsel %vm33, %v38, 0.0
  %46 = vrot.lane.b32.xlu0 %v12, 64
  %v47 = vpop.permute.xlu0 %46
  %48 = vrot.lane.b32.xlu0 %v13, 64
  %v49 = vpop.permute.xlu0 %48
  %50 = vrot.lane.b32.xlu0 %v14, 64
  %v51 = vpop.permute.xlu0 %50
  %52 = vrot.lane.b32.xlu0 %v15, 64
  %v53 = vpop.permute.xlu0 %52
  %vm58 = vcmask 523264
  %v59 = vsel %vm58, %v31, %v47
  %v60 = vsel %vm58, %v23, %v49
  %v61 = vsel %vm58, %v32, %v51
  %v62 = vsel %vm58, %v26, %v53
  %v63 = vpack.c.bf16 %v60, %v59
  %v64 = vpack.c.bf16 %v44, %v36
  %v65 = vpack.c.bf16 %v62, %v61
  %v66 = vpack.c.bf16 %v45, %v39
  %v67 = vld [vmem:[%s1] sm:$0xf]
  %v68 = vld [vmem:[%s1 + $0x4] sm:$0xf]
  %v69 = vld [vmem:[%s1 + $0x8] sm:$0xf]
  %v70 = vld [vmem:[%s1 + $0xc] sm:$0xf]
  %v71 = vld [vmem:[%s1 + $0x10] sm:$0xf]
  %v72 = vld [vmem:[%s1 + $0x14] sm:$0xf]
  %v73 = vld [vmem:[%s1 + $0x18] sm:$0xf]
  %v74 = vld [vmem:[%s1 + $0x1c] sm:$0xf]
  %v75 = vld [vmem:[%s1 + $0x20] sm:$0xf]
  %v76 = vld [vmem:[%s1 + $0x24] sm:$0xf]
  %v77 = vld [vmem:[%s1 + $0x28] sm:$0xf]
  %v78 = vld [vmem:[%s1 + $0x2c] sm:$0xf]
  %v79 = vld [vmem:[%s1 + $0x30] sm:$0xf]
  %v80 = vld [vmem:[%s1 + $0x34] sm:$0xf]
  %v81 = vld [vmem:[%s1 + $0x38] sm:$0xf]
  %v82 = vld [vmem:[%s1 + $0x3c] sm:$0xf]
  %v83 = vld [vmem:[%s1 + $0x40] sm:$0xf]
  %v84 = vld [vmem:[%s1 + $0x44] sm:$0xf]
  %v85 = vld [vmem:[%s1 + $0x48] sm:$0xf]
  %v86 = vld [vmem:[%s1 + $0x4c] sm:$0xf]
  %v87 = vld [vmem:[%s1 + $0x50] sm:$0xf]
  %v88 = vld [vmem:[%s1 + $0x54] sm:$0xf]
  %v89 = vld [vmem:[%s1 + $0x58] sm:$0xf]
  %v90 = vld [vmem:[%s1 + $0x5c] sm:$0xf]
  %v115 = vunpack.c.l.b16 %v67
  %v116 = vunpack.c.l.b16 %v68
  %v117 = vunpack.c.l.b16 %v69
  %v118 = vunpack.c.l.b16 %v70
  %v119 = vunpack.c.l.b16 %v71
  %v120 = vunpack.c.l.b16 %v72
  %v121 = vunpack.c.l.b16 %v73
  %v122 = vunpack.c.l.b16 %v74
  %v123 = vunpack.c.l.b16 %v75
  %v124 = vunpack.c.l.b16 %v76
  %v125 = vunpack.c.l.b16 %v77
  %v126 = vunpack.c.l.b16 %v78
  %v127 = vunpack.c.l.b16 %v79
  %v128 = vunpack.c.l.b16 %v80
  %v129 = vunpack.c.l.b16 %v81
  %v130 = vunpack.c.l.b16 %v82
  %v131 = vunpack.c.l.b16 %v83
  %v132 = vunpack.c.l.b16 %v84
  %v133 = vunpack.c.l.b16 %v85
  %v134 = vunpack.c.l.b16 %v86
  %v135 = vunpack.c.l.b16 %v87
  %v136 = vunpack.c.l.b16 %v88
  %v137 = vunpack.c.l.b16 %v89
  %v138 = vunpack.c.l.b16 %v90
  %v139 = vpack.c.b16 %v116, %v115
  %v140 = vpack.c.b16 %v118, %v117
  %v141 = vpack.c.b16 %v120, %v119
  %v142 = vpack.c.b16 %v122, %v121
  %v143 = vpack.c.b16 %v124, %v123
  %v144 = vpack.c.b16 %v126, %v125
  %v145 = vpack.c.b16 %v128, %v127
  %v146 = vpack.c.b16 %v130, %v129
  %v147 = vpack.c.b16 %v132, %v131
  %v148 = vpack.c.b16 %v134, %v133
  %v149 = vpack.c.b16 %v136, %v135
  %v150 = vpack.c.b16 %v138, %v137
  %v164 = vsel %vm58, %v64, 0
  %v167 = vsel %vm58, %v66, 0
  %169 = vmatpush.bf16.msra.mxu0 %v146
  %170 = vmatpush.bf16.msra.mxu0 %v145
  %171 = vmatpush.bf16.msra.mxu0 %v144
  %172 = vmatpush.bf16.msra.mxu0 %v143
  %173 = vmatpush.bf16.msra.mxu0 %v142
  %174 = vmatpush.bf16.msra.mxu0 %v141
  %175 = vmatpush.bf16.msra.mxu0 %v140
  %176 = vmatpush.bf16.msra.mxu0 %v139
  %177 = vmatmul.bf16.gmra.mxu0 %v63
  %v178 = vpop.f32.mrf.mxu0
  %v179 = vadd.f32 0.0, %v178
  %v180 = vpop.f32.mrf.mxu0
  %v181 = vadd.f32 0.0, %v180
  %182 = vmatmul.bf16.gmra.mxu0 %v65
  %v183 = vpop.f32.mrf.mxu0
  %v184 = vadd.f32 0.0, %v183
  %v185 = vpop.f32.mrf.mxu0
  %v186 = vadd.f32 0.0, %v185
  %187 = vdwg.mxu0
  %188 = vmatpush.bf16.msra.mxu0 0
  %189 = vmatpush.bf16.msra.mxu0 0
  %190 = vmatpush.bf16.msra.mxu0 0
  %191 = vmatpush.bf16.msra.mxu0 0
  %192 = vmatpush.bf16.msra.mxu0 %v150
  %193 = vmatpush.bf16.msra.mxu0 %v149
  %194 = vmatpush.bf16.msra.mxu0 %v148
  %195 = vmatpush.bf16.msra.mxu0 %v147
  %196 = vmatmul.bf16.gmra.mxu0 %v164
  %v197 = vpop.f32.mrf.mxu0
  %v198 = vadd.f32 %v179, %v197
  %v199 = vpop.f32.mrf.mxu0
  %v200 = vadd.f32 %v181, %v199
  %201 = vmatmul.bf16.gmra.mxu0 %v167
  %v202 = vpop.f32.mrf.mxu0
  %v203 = vadd.f32 %v184, %v202
  %v204 = vpop.f32.mrf.mxu0
  %v205 = vadd.f32 %v186, %v204
  %206 = vdwg.mxu0
  %v207 = vadd.f32 %v198, %v200
  %v208 = vadd.f32 %v207, %v203
  %v209 = vadd.f32 %v208, %v205
  %v210 = vrot.slane %v209, 4
  %v211 = vadd.f32 %v209, %v210
  %v212 = vrot.slane %v211, 2
  %v213 = vadd.f32 %v211, %v212
  %v214 = vrot.slane %v213, 1
  %v215 = vadd.f32 %v213, %v214
  %216 = vst [vmem:[%s2] sm:$0x1] %v215
  %v217 = vmul.f32 %v198, %v198
  %v218 = vmul.f32 %v200, %v200
  %v219 = vmul.f32 %v203, %v203
  %v220 = vmul.f32 %v205, %v205
  %v221 = vadd.f32 %v217, %v218
  %v222 = vadd.f32 %v221, %v219
  %v223 = vadd.f32 %v222, %v220
  %v224 = vrot.slane %v223, 4
  %v225 = vadd.f32 %v223, %v224
  %v226 = vrot.slane %v225, 2
  %v227 = vadd.f32 %v225, %v226
  %v228 = vrot.slane %v227, 1
  %v229 = vadd.f32 %v227, %v228
  %230 = vst [vmem:[%s2 + $0x1] sm:$0x1] %v229
  // Predicated region
  $region10: #{encoder_block.2} parent=0 // pred_check
    _
  $region11: #{encoder_block.2} parent=0 // pred_check_branch
    %232 = sbr.rel (0) target = $region13
  $region12: #{encoder_block.2} parent=0 // pred_region
    _
  $region13: #{encoder_block.2} parent=0 // pred_fallthru
    _
  // Predicated region
  $region14: #{encoder_block.2} parent=0 // pred_check
    _
  $region15: #{encoder_block.2} parent=0 // pred_check_branch
    %234 = sbr.rel (0) target = $region17
  $region16: #{encoder_block.2} parent=0 // pred_region
    _
  $region17: #{encoder_block.2} parent=0 // pred_fallthru
    _

// kernel: encoder_block.3
$region0: #{encoder_block.3}
  #allocation0 [shape = 'u32[]', space=smem, size = 0x4, offset = 0x4, fixed_abs, tag = 'smem constant byte address 0x4 - core index']
  #allocation1 [shape = 'u32[72,128]{1,0:T(1,128)}', space=vmem, size = 0x9000, scoped, tag = 'internal scratch']
  %s0 = inlined_call_operand.vmem [shape: f32[2,16,64], index: 0, kind: input, shape index: {}]
  %s1 = inlined_call_operand.vmem [shape: bf16[192,128], index: 1, kind: input, shape index: {}]
  %s2 = inlined_call_operand.vmem [shape: f32[1,128], index: 2, kind: input, shape index: {}]
  %s3 = inlined_call_operand.vmem [shape: f32[1,128], index: 3, kind: input, shape index: {}]
  %s4 = inlined_call_operand.vmem [shape: f32[2,16,128], index: 4, kind: output, shape index: {}]
  %s5 = sld [smem:[#allocation0]]
  $region26: #{encoder_block.3} parent=0
    _
  %s7 = ssub.s32 1, %s5
  %s8 = scalar_select 0, %s7, %s5
  // Predicated region
  $region2: #{encoder_block.3} parent=0 // pred_check
    _
  $region3: #{encoder_block.3} parent=0 // pred_check_branch
    %10 = sbr.rel (0) target = $region5
  $region4: #{encoder_block.3} parent=0 // pred_region
    _
  $region5: #{encoder_block.3} parent=0 // pred_fallthru
    _
  // Predicated region
  $region6: #{encoder_block.3} parent=0 // pred_check
    _
  $region7: #{encoder_block.3} parent=0 // pred_check_branch
    %12 = sbr.rel (0) target = $region9
  $region8: #{encoder_block.3} parent=0 // pred_region
    _
  $region9: #{encoder_block.3} parent=0 // pred_fallthru
    _
  // Predicated region
  $region10: #{encoder_block.3} parent=0 // pred_check
    _
  $region11: #{encoder_block.3} parent=0 // pred_check_branch
    %14 = sbr.rel (0) target = $region13
  $region12: #{encoder_block.3} parent=0 // pred_region
    _
  $region13: #{encoder_block.3} parent=0 // pred_fallthru
    _
  // Predicated region
  $region14: #{encoder_block.3} parent=0 // pred_check
    _
  $region15: #{encoder_block.3} parent=0 // pred_check_branch
    %16 = sbr.rel (0) target = $region17
  $region16: #{encoder_block.3} parent=0 // pred_region
    _
  $region17: #{encoder_block.3} parent=0 // pred_fallthru
    _
  %v18 = vld [vmem:[%s0] sm:$0xff]
  %v19 = vld [vmem:[%s0 + $0x8] sm:$0xff]
  %v20 = vld [vmem:[%s0 + $0x10] sm:$0xff]
  %v21 = vld [vmem:[%s0 + $0x18] sm:$0xff]
  %vm26 = vcmask 1040384
  %v27 = vrot.slane %v18, 7
  %v28 = vrot.slane %v19, 7
  %v29 = vsel %vm26, %v27, %v28
  %v30 = vrot.slane %v20, 7
  %v31 = vrot.slane %v21, 7
  %v32 = vsel %vm26, %v30, %v31
  %v37 = vsel %vm26, 0.0, %v27
  %v38 = vsel %vm26, 0.0, %v30
  %vm39 = vcmask 1046528
  %v40 = vrot.slane %v18, 1
  %v41 = vrot.slane %v19, 1
  %v42 = vsel %vm39, %v40, %v41
  %v43 = vrot.slane %v20, 1
  %v44 = vrot.slane %v21, 1
  %v45 = vsel %vm39, %v43, %v44
  %v50 = vsel %vm39, %v41, 0.0
  %v51 = vsel %vm39, %v44, 0.0
  %52 = vrot.lane.b32.xlu0 %v18, 64
  %v53 = vpop.permute.xlu0 %52
  %54 = vrot.lane.b32.xlu0 %v19, 64
  %v55 = vpop.permute.xlu0 %54
  %56 = vrot.lane.b32.xlu0 %v20, 64
  %v57 = vpop.permute.xlu0 %56
  %58 = vrot.lane.b32.xlu0 %v21, 64
  %v59 = vpop.permute.xlu0 %58
  %vm64 = vcmask 523264
  %v65 = vsel %vm64, %v37, %v53
  %v66 = vsel %vm64, %v29, %v55
  %v67 = vsel %vm64, %v38, %v57
  %v68 = vsel %vm64, %v32, %v59
  %v69 = vpack.c.bf16 %v66, %v65
  %v70 = vpack.c.bf16 %v50, %v42
  %v71 = vpack.c.bf16 %v68, %v67
  %v72 = vpack.c.bf16 %v51, %v45
  %v73 = vld [vmem:[%s1] sm:$0xf]
  %v74 = vld [vmem:[%s1 + $0x4] sm:$0xf]
  %v75 = vld [vmem:[%s1 + $0x8] sm:$0xf]
  %v76 = vld [vmem:[%s1 + $0xc] sm:$0xf]
  %v77 = vld [vmem:[%s1 + $0x10] sm:$0xf]
  %v78 = vld [vmem:[%s1 + $0x14] sm:$0xf]
  %v79 = vld [vmem:[%s1 + $0x18] sm:$0xf]
  %v80 = vld [vmem:[%s1 + $0x1c] sm:$0xf]
  %v81 = vld [vmem:[%s1 + $0x20] sm:$0xf]
  %v82 = vld [vmem:[%s1 + $0x24] sm:$0xf]
  %v83 = vld [vmem:[%s1 + $0x28] sm:$0xf]
  %v84 = vld [vmem:[%s1 + $0x2c] sm:$0xf]
  %v85 = vld [vmem:[%s1 + $0x30] sm:$0xf]
  %v86 = vld [vmem:[%s1 + $0x34] sm:$0xf]
  %v87 = vld [vmem:[%s1 + $0x38] sm:$0xf]
  %v88 = vld [vmem:[%s1 + $0x3c] sm:$0xf]
  %v89 = vld [vmem:[%s1 + $0x40] sm:$0xf]
  %v90 = vld [vmem:[%s1 + $0x44] sm:$0xf]
  %v91 = vld [vmem:[%s1 + $0x48] sm:$0xf]
  %v92 = vld [vmem:[%s1 + $0x4c] sm:$0xf]
  %v93 = vld [vmem:[%s1 + $0x50] sm:$0xf]
  %v94 = vld [vmem:[%s1 + $0x54] sm:$0xf]
  %v95 = vld [vmem:[%s1 + $0x58] sm:$0xf]
  %v96 = vld [vmem:[%s1 + $0x5c] sm:$0xf]
  %v121 = vunpack.c.l.b16 %v73
  %v122 = vunpack.c.l.b16 %v74
  %v123 = vunpack.c.l.b16 %v75
  %v124 = vunpack.c.l.b16 %v76
  %v125 = vunpack.c.l.b16 %v77
  %v126 = vunpack.c.l.b16 %v78
  %v127 = vunpack.c.l.b16 %v79
  %v128 = vunpack.c.l.b16 %v80
  %v129 = vunpack.c.l.b16 %v81
  %v130 = vunpack.c.l.b16 %v82
  %v131 = vunpack.c.l.b16 %v83
  %v132 = vunpack.c.l.b16 %v84
  %v133 = vunpack.c.l.b16 %v85
  %v134 = vunpack.c.l.b16 %v86
  %v135 = vunpack.c.l.b16 %v87
  %v136 = vunpack.c.l.b16 %v88
  %v137 = vunpack.c.l.b16 %v89
  %v138 = vunpack.c.l.b16 %v90
  %v139 = vunpack.c.l.b16 %v91
  %v140 = vunpack.c.l.b16 %v92
  %v141 = vunpack.c.l.b16 %v93
  %v142 = vunpack.c.l.b16 %v94
  %v143 = vunpack.c.l.b16 %v95
  %v144 = vunpack.c.l.b16 %v96
  %v145 = vpack.c.b16 %v122, %v121
  %v146 = vpack.c.b16 %v124, %v123
  %v147 = vpack.c.b16 %v126, %v125
  %v148 = vpack.c.b16 %v128, %v127
  %v149 = vpack.c.b16 %v130, %v129
  %v150 = vpack.c.b16 %v132, %v131
  %v151 = vpack.c.b16 %v134, %v133
  %v152 = vpack.c.b16 %v136, %v135
  %v153 = vpack.c.b16 %v138, %v137
  %v154 = vpack.c.b16 %v140, %v139
  %v155 = vpack.c.b16 %v142, %v141
  %v156 = vpack.c.b16 %v144, %v143
  %v170 = vsel %vm64, %v70, 0
  %v173 = vsel %vm64, %v72, 0
  %175 = vmatpush.bf16.msra.mxu0 %v152
  %176 = vmatpush.bf16.msra.mxu0 %v151
  %177 = vmatpush.bf16.msra.mxu0 %v150
  %178 = vmatpush.bf16.msra.mxu0 %v149
  %179 = vmatpush.bf16.msra.mxu0 %v148
  %180 = vmatpush.bf16.msra.mxu0 %v147
  %181 = vmatpush.bf16.msra.mxu0 %v146
  %182 = vmatpush.bf16.msra.mxu0 %v145
  %183 = vmatmul.bf16.gmra.mxu0 %v69
  %v184 = vpop.f32.mrf.mxu0
  %v185 = vadd.f32 0.0, %v184
  %v186 = vpop.f32.mrf.mxu0
  %v187 = vadd.f32 0.0, %v186
  %188 = vmatmul.bf16.gmra.mxu0 %v71
  %v189 = vpop.f32.mrf.mxu0
  %v190 = vadd.f32 0.0, %v189
  %v191 = vpop.f32.mrf.mxu0
  %v192 = vadd.f32 0.0, %v191
  %193 = vdwg.mxu0
  %194 = vmatpush.bf16.msra.mxu0 0
  %195 = vmatpush.bf16.msra.mxu0 0
  %196 = vmatpush.bf16.msra.mxu0 0
  %197 = vmatpush.bf16.msra.mxu0 0
  %198 = vmatpush.bf16.msra.mxu0 %v156
  %199 = vmatpush.bf16.msra.mxu0 %v155
  %200 = vmatpush.bf16.msra.mxu0 %v154
  %201 = vmatpush.bf16.msra.mxu0 %v153
  %202 = vmatmul.bf16.gmra.mxu0 %v170
  %v203 = vpop.f32.mrf.mxu0
  %v204 = vadd.f32 %v185, %v203
  %v205 = vpop.f32.mrf.mxu0
  %v206 = vadd.f32 %v187, %v205
  %207 = vmatmul.bf16.gmra.mxu0 %v173
  %v208 = vpop.f32.mrf.mxu0
  %v209 = vadd.f32 %v190, %v208
  %v210 = vpop.f32.mrf.mxu0
  %v211 = vadd.f32 %v192, %v210
  %212 = vdwg.mxu0
  %v213 = vld [vmem:[%s2] sm:$0x1]
  %v215 = vperm.slane %v213, 0
  %v217 = vmul.f32 %v204, %v215
  %v218 = vmul.f32 %v206, %v215
  %v219 = vmul.f32 %v209, %v215
  %v220 = vmul.f32 %v211, %v215
  %v221 = vld [vmem:[%s3] sm:$0x1]
  %v223 = vperm.slane %v221, 0
  %v225 = vadd.f32 %v217, %v223
  %v226 = vadd.f32 %v218, %v223
  %v227 = vadd.f32 %v219, %v223
  %v228 = vadd.f32 %v220, %v223
  %v229 = vmax.f32 %v225, 0.0
  %v230 = vmax.f32 %v226, 0.0
  %v231 = vmax.f32 %v227, 0.0
  %v232 = vmax.f32 %v228, 0.0
  %233 = vst [vmem:[%s4] sm:$0xff] %v229
  %234 = vst [vmem:[%s4 + $0x8] sm:$0xff] %v230
  %235 = vst [vmem:[%s4 + $0x10] sm:$0xff] %v231
  %236 = vst [vmem:[%s4 + $0x18] sm:$0xff] %v232
  // Predicated region
  $region18: #{encoder_block.3} parent=0 // pred_check
    _
  $region19: #{encoder_block.3} parent=0 // pred_check_branch
    %238 = sbr.rel (0) target = $region21
  $region20: #{encoder_block.3} parent=0 // pred_region
    _
  $region21: #{encoder_block.3} parent=0 // pred_fallthru
    _
  // Predicated region
  $region22: #{encoder_block.3} parent=0 // pred_check
    _
  $region23: #{encoder_block.3} parent=0 // pred_check_branch
    %240 = sbr.rel (0) target = $region25
  $region24: #{encoder_block.3} parent=0 // pred_region
    _
  $region25: #{encoder_block.3} parent=0 // pred_fallthru
    _

</llo_original>
